<compile_context>
chip_gen: v7x
topology: tpu7x:2x2x1
jax: 0.10.0
libtpu: 0.0.40
codegen_flags: <defaults>
</compile_context>

<pallas_src>
import functools

import jax
import jax.numpy as jnp
from jax.experimental import pallas as pl


# ----------------------------------------------------------------------------
# Single fused kernel, one invocation for the whole batch, two outputs.
#   seq path : softmax over token axis, then 'b s t -> b t s' transpose
#   text path: Linear(in_dim -> con_dim) via VPU FMAs, zero rows past text_len,
#              concat positional rows -> one lane-dense (B, max_len, 128) store
# ----------------------------------------------------------------------------
def fused_designer_kernel(logits_ref, x_ref, w_ref, b_ref, pos_ref,
                          seq_out_ref, text_out_ref, *,
                          text_len, text_max_len, in_dim, con_dim, pos_dim):
    # --- (1) softmax(dim=2) + transpose ('b s t -> b t s') ---------------------------
    xl = logits_ref[...].astype(jnp.float32)                     # (B, S, T)
    m = jnp.max(xl, axis=-1, keepdims=True)
    e = jnp.exp(xl - m)
    p = e / jnp.sum(e, axis=-1, keepdims=True)                   # exact normalization
    seq_out_ref[...] = jnp.transpose(p, (0, 2, 1)).astype(seq_out_ref.dtype)  # (B, T, S)

    # --- (2) Linear(in_dim=3 -> con_dim) as VPU FMAs + pad + pos concat --------------
    B = x_ref.shape[0]
    # raw 'b m n' input; tiny (in_dim x text_len) relayout done here instead of in XLA
    x = jnp.transpose(x_ref[...].astype(jnp.float32), (0, 2, 1))  # (B, text_len, in_dim)
    w = w_ref[...].astype(jnp.float32)                            # (in_dim, con_dim)
    lin = jnp.broadcast_to(b_ref[...].astype(jnp.float32)[None],
                           (B, text_len, con_dim))
    for k in range(in_dim):                                       # static unroll (in_dim == 3)
        lin = lin + x[:, :, k:k + 1] * w[k:k + 1, :]
    if text_len < text_max_len:
        # torch zero-pads *after* the Linear: padded rows are exact zeros (no bias leak)
        lin = jnp.concatenate(
            [lin, jnp.zeros((B, text_max_len - text_len, con_dim), jnp.float32)],
            axis=1)
    pos = jnp.broadcast_to(pos_ref[...].astype(jnp.float32)[None],
                           (B, text_max_len, pos_dim))
    # single full-width (128-lane) unmasked store of the fused text embedding
    text_out_ref[...] = jnp.concatenate([lin, pos], axis=-1).astype(text_out_ref.dtype)


# ----------------------------------------------------------------------------
# ProteinDesigner_Base.forward equivalent (loss computation by the external
# ElucidatedImagen_OneD diffuser and the ESM pLM call are not part of this
# module's own code).
# ----------------------------------------------------------------------------
@functools.partial(jax.jit, static_argnames=("text_max_len",))
def protein_designer_forward(params, seq_objs_logits, text_con_input, *, text_max_len):
    B, S, T = seq_objs_logits.shape
    _, in_dim, n = text_con_input.shape
    assert n <= text_max_len, "text_embed length is larger than defined text_max_len"

    w_t = params["w_con_t"]                 # (in_dim, con_dim)  == Linear.weight.T
    con_dim = w_t.shape[1]
    pos_table = params["pos_table"]         # (text_max_len + 1, pos_dim)
    pos_dim = pos_table.shape[1]
    emb_dim = con_dim + pos_dim

    bias2d = params["b_con"].reshape(1, con_dim)
    # Embedding lookup of indices [1..text_max_len] (batch-invariant, sliced once)
    pos_rows = pos_table[1:text_max_len + 1, :]                   # (text_max_len, pos_dim)

    kernel = functools.partial(
        fused_designer_kernel,
        text_len=n, text_max_len=text_max_len,
        in_dim=in_dim, con_dim=con_dim, pos_dim=pos_dim)

    seq_embeds, text_embeds = pl.pallas_call(
        kernel,
        out_shape=(
            jax.ShapeDtypeStruct((B, T, S), jnp.float32),                 # 'b t s'
            jax.ShapeDtypeStruct((B, text_max_len, emb_dim), jnp.float32),  # con ++ pos
        ),
        # single grid step: whole (tiny) problem in one invocation
        in_specs=[
            pl.BlockSpec((B, S, T), lambda: (0, 0, 0)),
            pl.BlockSpec((B, in_dim, n), lambda: (0, 0, 0)),
            pl.BlockSpec((in_dim, con_dim), lambda: (0, 0)),
            pl.BlockSpec((1, con_dim), lambda: (0, 0)),
            pl.BlockSpec((text_max_len, pos_dim), lambda: (0, 0)),
        ],
        out_specs=(
            pl.BlockSpec((B, T, S), lambda: (0, 0, 0)),
            pl.BlockSpec((B, text_max_len, emb_dim), lambda: (0, 0, 0)),
        ),
    )(seq_objs_logits, text_con_input, w_t, bias2d, pos_rows)

    # TODO(synk): self.diffuser_core(seq_objs_embeds, text_embeds=...) — ElucidatedImagen_OneD
    # and its Unet (and the ESM pLM producing the logits) are external submodules passed
    # to __init__, not translated here.
    return seq_embeds, text_embeds


if __name__ == "__main__":
    # small shapes consistent with the module
    B = 2
    SEQ_LEN = 16          # seq_obj length (<= seq_obj_max_size)
    LEN_TOKS = 32         # pLM vocabulary size == unet.channels for the softmax branch
    IN_DIM = 3            # text_embed_input_dim
    CON_DIM = 96          # text_con_embed_dim (scaled down from 768)
    POS_DIM = 32          # text_pos_embed_dim (CON_DIM + POS_DIM = 128 = unet.text_embed_dim)
    TEXT_MAX_LEN = 16     # unet.max_text_len
    TEXT_LEN = 8          # actual conditioning length (< TEXT_MAX_LEN -> exercises padding)

    key = jax.random.PRNGKey(0)
    k1, k2, k3, k4, k5 = jax.random.split(key, 5)

    # deterministic parameter init (nn.Linear + nn.Embedding shapes)
    w_con = jax.random.normal(k1, (CON_DIM, IN_DIM), jnp.float32) * 0.1   # Linear.weight (out,in)
    b_con = jax.random.normal(k2, (CON_DIM,), jnp.float32) * 0.1          # Linear.bias
    pos_table = jax.random.normal(k3, (TEXT_MAX_LEN + 1, POS_DIM), jnp.float32) * 0.1
    params = {"w_con_t": w_con.T, "b_con": b_con, "pos_table": pos_table}

    # synthetic inputs: pLM logits stand in for the external ESM model's output
    seq_objs_logits = jax.random.normal(k4, (B, SEQ_LEN, LEN_TOKS), jnp.float32)
    text_con_input = jax.random.normal(k5, (B, IN_DIM, TEXT_LEN), jnp.float32)  # 'b m n'

    seq_embeds, text_embeds = protein_designer_forward(
        params, seq_objs_logits, text_con_input, text_max_len=TEXT_MAX_LEN)
    jax.block_until_ready((seq_embeds, text_embeds))

    # correctness checks against plain-JAX reference
    ref_seq = jnp.transpose(jax.nn.softmax(seq_objs_logits, axis=2), (0, 2, 1))
    x_ref = jnp.transpose(text_con_input, (0, 2, 1))
    ref_lin = x_ref @ w_con.T + b_con
    ref_con = jnp.zeros((B, TEXT_MAX_LEN, CON_DIM)).at[:, :TEXT_LEN, :].set(ref_lin)
    ref_pos = jnp.broadcast_to(pos_table[1:TEXT_MAX_LEN + 1], (B, TEXT_MAX_LEN, POS_DIM))
    ref_text = jnp.concatenate([ref_con, ref_pos], axis=2)

    assert seq_embeds.shape == (B, LEN_TOKS, SEQ_LEN)
    assert text_embeds.shape == (B, TEXT_MAX_LEN, CON_DIM + POS_DIM)
    # exact softmax normalization restored -> tight tolerances
    assert jnp.allclose(seq_embeds, ref_seq, atol=1e-5)
    assert jnp.allclose(text_embeds, ref_text, atol=1e-5)

    print("KERNEL_OK")
</pallas_src>

<mosaic_0001>
module attributes {stable_mosaic.version = 11 : i64} {
  func.func @fused_designer_kernel(%arg0: memref<2x16x32xf32, #tpu.memory_space<vmem>>, %arg1: memref<2x3x8xf32, #tpu.memory_space<vmem>>, %arg2: memref<3x96xf32, #tpu.memory_space<vmem>>, %arg3: memref<1x96xf32, #tpu.memory_space<vmem>>, %arg4: memref<16x32xf32, #tpu.memory_space<vmem>>, %arg5: memref<2x32x16xf32, #tpu.memory_space<vmem>>, %arg6: memref<2x16x128xf32, #tpu.memory_space<vmem>>) attributes {dimension_semantics = [], scalar_prefetch = 0 : i64, scratch_operands = 0 : i64, tpu.core_type = #tpu.core_type<tc>} {
    %c0 = arith.constant 0 : index
    %c0_0 = arith.constant 0 : index
    %c0_1 = arith.constant 0 : index
    %0 = vector.load %arg0[%c0, %c0_0, %c0_1] : memref<2x16x32xf32, #tpu.memory_space<vmem>>, vector<2x16x32xf32>
    %cst = arith.constant dense<0xFF800000> : vector<2x16xf32>
    %1 = vector.multi_reduction <maximumf>, %0, %cst [2] : vector<2x16x32xf32> to vector<2x16xf32>
    %2 = vector.shape_cast %1 : vector<2x16xf32> to vector<2x16x1xf32>
    %3 = vector.broadcast %2 : vector<2x16x1xf32> to vector<2x16x32xf32>
    %4 = arith.subf %0, %3 : vector<2x16x32xf32>
    %5 = math.exp %4 : vector<2x16x32xf32>
    %cst_2 = arith.constant dense<0.000000e+00> : vector<2x16xf32>
    %6 = vector.multi_reduction <add>, %5, %cst_2 [2] : vector<2x16x32xf32> to vector<2x16xf32>
    %7 = vector.shape_cast %6 : vector<2x16xf32> to vector<2x16x1xf32>
    %8 = vector.broadcast %7 : vector<2x16x1xf32> to vector<2x16x32xf32>
    %9 = arith.divf %5, %8 : vector<2x16x32xf32>
    %10 = tpu.transpose %9, [0, 2, 1] : vector<2x16x32xf32> -> vector<2x32x16xf32>
    %c0_3 = arith.constant 0 : index
    %c0_4 = arith.constant 0 : index
    %c0_5 = arith.constant 0 : index
    %11 = vector.load %arg5[%c0_3, %c0_4, %c0_5] : memref<2x32x16xf32, #tpu.memory_space<vmem>>, vector<2x32x16xf32>
    tpu.vector_store %arg5[%c0_3, %c0_4, %c0_5], %10 {strides = array<i32>} : memref<2x32x16xf32, #tpu.memory_space<vmem>>, vector<2x32x16xf32>,
    %c0_6 = arith.constant 0 : index
    %c0_7 = arith.constant 0 : index
    %c0_8 = arith.constant 0 : index
    %12 = vector.load %arg1[%c0_6, %c0_7, %c0_8] : memref<2x3x8xf32, #tpu.memory_space<vmem>>, vector<2x3x8xf32>
    %13 = tpu.transpose %12, [0, 2, 1] : vector<2x3x8xf32> -> vector<2x8x3xf32>
    %c0_9 = arith.constant 0 : index
    %c0_10 = arith.constant 0 : index
    %14 = vector.load %arg2[%c0_9, %c0_10] : memref<3x96xf32, #tpu.memory_space<vmem>>, vector<3x96xf32>
    %c0_11 = arith.constant 0 : index
    %c0_12 = arith.constant 0 : index
    %15 = vector.load %arg3[%c0_11, %c0_12] : memref<1x96xf32, #tpu.memory_space<vmem>>, vector<1x96xf32>
    %16 = vector.shape_cast %15 : vector<1x96xf32> to vector<1x1x96xf32>
    %17 = vector.shape_cast %16 : vector<1x1x96xf32> to vector<1x1x96xf32>
    %18 = vector.broadcast %17 : vector<1x1x96xf32> to vector<2x8x96xf32>
    %19 = vector.extract_strided_slice %13 {offsets = [0, 0, 0], sizes = [2, 8, 1], strides = [1, 1, 1]} : vector<2x8x3xf32> to vector<2x8x1xf32>
    %20 = vector.extract_strided_slice %14 {offsets = [0, 0], sizes = [1, 96], strides = [1, 1]} : vector<3x96xf32> to vector<1x96xf32>
    %21 = vector.shape_cast %20 : vector<1x96xf32> to vector<1x1x96xf32>
    %22 = vector.broadcast %19 : vector<2x8x1xf32> to vector<2x8x96xf32>
    %23 = vector.broadcast %21 : vector<1x1x96xf32> to vector<2x8x96xf32>
    %24 = arith.mulf %22, %23 : vector<2x8x96xf32>
    %25 = arith.addf %18, %24 : vector<2x8x96xf32>
    %26 = vector.extract_strided_slice %13 {offsets = [0, 0, 1], sizes = [2, 8, 1], strides = [1, 1, 1]} : vector<2x8x3xf32> to vector<2x8x1xf32>
    %27 = vector.extract_strided_slice %14 {offsets = [1, 0], sizes = [1, 96], strides = [1, 1]} : vector<3x96xf32> to vector<1x96xf32>
    %28 = vector.shape_cast %27 : vector<1x96xf32> to vector<1x1x96xf32>
    %29 = vector.broadcast %26 : vector<2x8x1xf32> to vector<2x8x96xf32>
    %30 = vector.broadcast %28 : vector<1x1x96xf32> to vector<2x8x96xf32>
    %31 = arith.mulf %29, %30 : vector<2x8x96xf32>
    %32 = arith.addf %25, %31 : vector<2x8x96xf32>
    %33 = vector.extract_strided_slice %13 {offsets = [0, 0, 2], sizes = [2, 8, 1], strides = [1, 1, 1]} : vector<2x8x3xf32> to vector<2x8x1xf32>
    %34 = vector.extract_strided_slice %14 {offsets = [2, 0], sizes = [1, 96], strides = [1, 1]} : vector<3x96xf32> to vector<1x96xf32>
    %35 = vector.shape_cast %34 : vector<1x96xf32> to vector<1x1x96xf32>
    %36 = vector.broadcast %33 : vector<2x8x1xf32> to vector<2x8x96xf32>
    %37 = vector.broadcast %35 : vector<1x1x96xf32> to vector<2x8x96xf32>
    %38 = arith.mulf %36, %37 : vector<2x8x96xf32>
    %39 = arith.addf %32, %38 : vector<2x8x96xf32>
    %cst_13 = arith.constant 0.000000e+00 : f32
    %40 = vector.broadcast %cst_13 : f32 to vector<2x8x96xf32>
    %41 = tpu.concatenate %39, %40 in 1 : vector<2x8x96xf32>, vector<2x8x96xf32> -> vector<2x16x96xf32>
    %c0_14 = arith.constant 0 : index
    %c0_15 = arith.constant 0 : index
    %42 = vector.load %arg4[%c0_14, %c0_15] : memref<16x32xf32, #tpu.memory_space<vmem>>, vector<16x32xf32>
    %43 = vector.shape_cast %42 : vector<16x32xf32> to vector<1x16x32xf32>
    %44 = vector.shape_cast %43 : vector<1x16x32xf32> to vector<1x16x32xf32>
    %45 = vector.broadcast %44 : vector<1x16x32xf32> to vector<2x16x32xf32>
    %46 = tpu.concatenate %41, %45 in 2 : vector<2x16x96xf32>, vector<2x16x32xf32> -> vector<2x16x128xf32>
    %c0_16 = arith.constant 0 : index
    %c0_17 = arith.constant 0 : index
    %c0_18 = arith.constant 0 : index
    %47 = vector.load %arg6[%c0_16, %c0_17, %c0_18] : memref<2x16x128xf32, #tpu.memory_space<vmem>>, vector<2x16x128xf32>
    tpu.vector_store %arg6[%c0_16, %c0_17, %c0_18], %46 {strides = array<i32>} : memref<2x16x128xf32, #tpu.memory_space<vmem>>, vector<2x16x128xf32>,
    return
  }
}

</mosaic_0001>

<llo_original>
// kernel: protein_designer_forward.1
$region0: #{protein_designer_forward.1}
  #allocation0 [shape = 'u32[]', space=smem, size = 0x4, offset = 0x4, fixed_abs, tag = 'smem constant byte address 0x4 - core index']
  #allocation1 [shape = 'u32[144,128]{1,0:T(1,128)}', space=vmem, size = 0x12000, scoped, tag = 'internal scratch']
  %s0 = inlined_call_operand.vmem [shape: f32[2,16,32], index: 0, kind: input, shape index: {}]
  %s1 = inlined_call_operand.vmem [shape: f32[2,3,8], index: 1, kind: input, shape index: {}]
  %s2 = inlined_call_operand.vmem [shape: f32[3,96], index: 2, kind: input, shape index: {}]
  %s3 = inlined_call_operand.vmem [shape: f32[1,96], index: 3, kind: input, shape index: {}]
  %s4 = inlined_call_operand.vmem [shape: f32[16,32], index: 4, kind: input, shape index: {}]
  %s5 = inlined_call_operand.vmem [shape: f32[2,32,16], index: 5, kind: output, shape index: {0}]
  %s6 = inlined_call_operand.hbm [shape: f32[2,16,128], index: 6, kind: output, shape index: {1}]
  %7 = xla_tuple %s5, %s6
  %s8 = sld [smem:[#allocation0]]
  $region38: #{protein_designer_forward.1} parent=0
    _
  %s10 = ssub.s32 1, %s8
  %s11 = scalar_select 0, %s10, %s8
  $region1: #{protein_designer_forward.1} parent=0
    #allocation2 [shape = 'u8[16384]{0}', space=vmem, size = 0x4000, scoped, tag = 'output window, operand 1, single buffered']
    #allocation3 [shape = 's32[1]{0}', space=sflag, size = 0x4, scoped, tag = 'scoped memory for protein_designer_forward.1']
    %12 = vsyncpa [#allocation3], 0
    // Predicated region
    $region2: #{protein_designer_forward.1} parent=1 // pred_check
      _
    $region3: #{protein_designer_forward.1} parent=1 // pred_check_branch
      %14 = sbr.rel (0) target = $region5
    $region4: #{protein_designer_forward.1} parent=1 // pred_region
      _
    $region5: #{protein_designer_forward.1} parent=1 // pred_fallthru
      _
    // Predicated region
    $region6: #{protein_designer_forward.1} parent=1 // pred_check
      _
    $region7: #{protein_designer_forward.1} parent=1 // pred_check_branch
      %16 = sbr.rel (0) target = $region9
    $region8: #{protein_designer_forward.1} parent=1 // pred_region
      _
    $region9: #{protein_designer_forward.1} parent=1 // pred_fallthru
      _
    // Predicated region
    $region10: #{protein_designer_forward.1} parent=1 // pred_check
      _
    $region11: #{protein_designer_forward.1} parent=1 // pred_check_branch
      %18 = sbr.rel (0) target = $region13
    $region12: #{protein_designer_forward.1} parent=1 // pred_region
      _
    $region13: #{protein_designer_forward.1} parent=1 // pred_fallthru
      _
    // Predicated region
    $region14: #{protein_designer_forward.1} parent=1 // pred_check
      _
    $region15: #{protein_designer_forward.1} parent=1 // pred_check_branch
      %20 = sbr.rel (0) target = $region17
    $region16: #{protein_designer_forward.1} parent=1 // pred_region
      _
    $region17: #{protein_designer_forward.1} parent=1 // pred_fallthru
      _
    // Predicated region
    $region18: #{protein_designer_forward.1} parent=1 // pred_check
      _
    $region19: #{protein_designer_forward.1} parent=1 // pred_check_branch
      %22 = sbr.rel (0) target = $region21
    $region20: #{protein_designer_forward.1} parent=1 // pred_region
      _
    $region21: #{protein_designer_forward.1} parent=1 // pred_fallthru
      _
    %v23 = vld [vmem:[%s0] sm:$0xff]
    %v24 = vld [vmem:[%s0 + $0x8] sm:$0xff]
    %v25 = vld [vmem:[%s0 + $0x10] sm:$0xff]
    %v26 = vld [vmem:[%s0 + $0x18] sm:$0xff]
    %vm27 = vcmask 261120
    %v28 = vsel %vm27, %v23, -inf
    %29 = vmax.xlane.f32.xlu0 %v28
    %v30 = vpop.xlane.xlu0 %29
    %v31 = vsel %vm27, %v24, -inf
    %32 = vmax.xlane.f32.xlu0 %v31
    %v33 = vpop.xlane.xlu0 %32
    %v34 = vsel %vm27, %v25, -inf
    %35 = vmax.xlane.f32.xlu0 %v34
    %v36 = vpop.xlane.xlu0 %35
    %v37 = vsel %vm27, %v26, -inf
    %38 = vmax.xlane.f32.xlu0 %v37
    %v39 = vpop.xlane.xlu0 %38
    %v40 = vsub.f32 %v23, %v30
    %v41 = vsub.f32 %v24, %v33
    %v42 = vsub.f32 %v25, %v36
    %v43 = vsub.f32 %v26, %v39
    %v44 = vmul.f32 %v40, 1.442695
    %v45 = vpow.pop %v44
    %v46 = vmul.f32 %v41, 1.442695
    %v47 = vpow.pop %v46
    %v48 = vmul.f32 %v42, 1.442695
    %v49 = vpow.pop %v48
    %v50 = vmul.f32 %v43, 1.442695
    %v51 = vpow.pop %v50
    %v52 = vsel %vm27, %v45, 0.0
    %53 = vadd.xlane.f32.xlu0 %v52
    %v54 = vpop.xlane.xlu0 %53
    %v55 = vsel %vm27, %v47, 0.0
    %56 = vadd.xlane.f32.xlu0 %v55
    %v57 = vpop.xlane.xlu0 %56
    %v58 = vsel %vm27, %v49, 0.0
    %59 = vadd.xlane.f32.xlu0 %v58
    %v60 = vpop.xlane.xlu0 %59
    %v61 = vsel %vm27, %v51, 0.0
    %62 = vadd.xlane.f32.xlu0 %v61
    %v63 = vpop.xlane.xlu0 %62
    %v64 = vrcp.pop %v54
    %v65 = vmul.f32 %v45, %v64
    %v66 = vrcp.pop %v57
    %v67 = vmul.f32 %v47, %v66
    %v68 = vrcp.pop %v60
    %v69 = vmul.f32 %v49, %v68
    %v70 = vrcp.pop %v63
    %v71 = vmul.f32 %v51, %v70
    %72 = vxpose.xlu0.b32.start [1/16] %v65, 128
    %73 = vxpose.xlu0.b32.cont [2/16] %v67, 128
    %74 = vxpose.xlu0.b32.cont [3/16] 0.0, 128
    %75 = vxpose.xlu0.b32.cont [4/16] 0.0, 128
    %76 = vxpose.xlu0.b32.cont [5/16] 0.0, 128
    %77 = vxpose.xlu0.b32.cont [6/16] 0.0, 128
    %78 = vxpose.xlu0.b32.cont [7/16] 0.0, 128
    %79 = vxpose.xlu0.b32.cont [8/16] 0.0, 128
    %80 = vxpose.xlu0.b32.cont [9/16] 0.0, 128
    %81 = vxpose.xlu0.b32.cont [10/16] 0.0, 128
    %82 = vxpose.xlu0.b32.cont [11/16] 0.0, 128
    %83 = vxpose.xlu0.b32.cont [12/16] 0.0, 128
    %84 = vxpose.xlu0.b32.cont [13/16] 0.0, 128
    %85 = vxpose.xlu0.b32.cont [14/16] 0.0, 128
    %86 = vxpose.xlu0.b32.cont [15/16] 0.0, 128
    %87 = vxpose.xlu0.b32.end [16/16] 0.0, 128
    %v88 = vpop.trf.xlu0
    %v89 = vpop.trf.xlu0
    %v90 = vpop.trf.xlu0
    %v91 = vpop.trf.xlu0
    %v92 = vpop.trf.xlu0
    %v93 = vpop.trf.xlu0
    %v94 = vpop.trf.xlu0
    %v95 = vpop.trf.xlu0
    %v96 = vpop.trf.xlu0
    %v97 = vpop.trf.xlu0
    %v98 = vpop.trf.xlu0
    %v99 = vpop.trf.xlu0
    %v100 = vpop.trf.xlu0
    %v101 = vpop.trf.xlu0
    %v102 = vpop.trf.xlu0
    %v103 = vpop.trf.xlu0
    %104 = vxpose.xlu0.b32.start [1/16] %v69, 128
    %105 = vxpose.xlu0.b32.cont [2/16] %v71, 128
    %106 = vxpose.xlu0.b32.cont [3/16] 0.0, 128
    %107 = vxpose.xlu0.b32.cont [4/16] 0.0, 128
    %108 = vxpose.xlu0.b32.cont [5/16] 0.0, 128
    %109 = vxpose.xlu0.b32.cont [6/16] 0.0, 128
    %110 = vxpose.xlu0.b32.cont [7/16] 0.0, 128
    %111 = vxpose.xlu0.b32.cont [8/16] 0.0, 128
    %112 = vxpose.xlu0.b32.cont [9/16] 0.0, 128
    %113 = vxpose.xlu0.b32.cont [10/16] 0.0, 128
    %114 = vxpose.xlu0.b32.cont [11/16] 0.0, 128
    %115 = vxpose.xlu0.b32.cont [12/16] 0.0, 128
    %116 = vxpose.xlu0.b32.cont [13/16] 0.0, 128
    %117 = vxpose.xlu0.b32.cont [14/16] 0.0, 128
    %118 = vxpose.xlu0.b32.cont [15/16] 0.0, 128
    %119 = vxpose.xlu0.b32.end [16/16] 0.0, 128
    %v120 = vpop.trf.xlu0
    %v121 = vpop.trf.xlu0
    %v122 = vpop.trf.xlu0
    %v123 = vpop.trf.xlu0
    %v124 = vpop.trf.xlu0
    %v125 = vpop.trf.xlu0
    %v126 = vpop.trf.xlu0
    %v127 = vpop.trf.xlu0
    %v128 = vpop.trf.xlu0
    %v129 = vpop.trf.xlu0
    %v130 = vpop.trf.xlu0
    %v131 = vpop.trf.xlu0
    %v132 = vpop.trf.xlu0
    %v133 = vpop.trf.xlu0
    %v134 = vpop.trf.xlu0
    %v135 = vpop.trf.xlu0
    %vm136 = vcmask 130048
    %137 = vst.msk [vmem:[%s5] sm:$0xff] %vm136, %v88
    %138 = vst.msk [vmem:[%s5 + $0x8] sm:$0xff] %vm136, %v89
    %139 = vst.msk [vmem:[%s5 + $0x10] sm:$0xff] %vm136, %v90
    %140 = vst.msk [vmem:[%s5 + $0x18] sm:$0xff] %vm136, %v91
    %141 = vst.msk [vmem:[%s5 + $0x20] sm:$0xff] %vm136, %v120
    %142 = vst.msk [vmem:[%s5 + $0x28] sm:$0xff] %vm136, %v121
    %143 = vst.msk [vmem:[%s5 + $0x30] sm:$0xff] %vm136, %v122
    %144 = vst.msk [vmem:[%s5 + $0x38] sm:$0xff] %vm136, %v123
    %v145 = vld [vmem:[%s1] sm:$0x7]
    %v146 = vld [vmem:[%s1 + $0x4] sm:$0x7]
    %147 = vxpose.xlu0.b32.start [1/16] %v145, 128
    %148 = vxpose.xlu0.b32.cont [2/16] 0.0, 128
    %149 = vxpose.xlu0.b32.cont [3/16] 0.0, 128
    %150 = vxpose.xlu0.b32.cont [4/16] 0.0, 128
    %151 = vxpose.xlu0.b32.cont [5/16] 0.0, 128
    %152 = vxpose.xlu0.b32.cont [6/16] 0.0, 128
    %153 = vxpose.xlu0.b32.cont [7/16] 0.0, 128
    %154 = vxpose.xlu0.b32.cont [8/16] 0.0, 128
    %155 = vxpose.xlu0.b32.cont [9/16] 0.0, 128
    %156 = vxpose.xlu0.b32.cont [10/16] 0.0, 128
    %157 = vxpose.xlu0.b32.cont [11/16] 0.0, 128
    %158 = vxpose.xlu0.b32.cont [12/16] 0.0, 128
    %159 = vxpose.xlu0.b32.cont [13/16] 0.0, 128
    %160 = vxpose.xlu0.b32.cont [14/16] 0.0, 128
    %161 = vxpose.xlu0.b32.cont [15/16] 0.0, 128
    %162 = vxpose.xlu0.b32.end [16/16] 0.0, 128
    %v163 = vpop.trf.xlu0
    %v164 = vpop.trf.xlu0
    %v165 = vpop.trf.xlu0
    %v166 = vpop.trf.xlu0
    %v167 = vpop.trf.xlu0
    %v168 = vpop.trf.xlu0
    %v169 = vpop.trf.xlu0
    %v170 = vpop.trf.xlu0
    %v171 = vpop.trf.xlu0
    %v172 = vpop.trf.xlu0
    %v173 = vpop.trf.xlu0
    %v174 = vpop.trf.xlu0
    %v175 = vpop.trf.xlu0
    %v176 = vpop.trf.xlu0
    %v177 = vpop.trf.xlu0
    %v178 = vpop.trf.xlu0
    %179 = vxpose.xlu0.b32.start [1/16] %v146, 128
    %180 = vxpose.xlu0.b32.cont [2/16] 0.0, 128
    %181 = vxpose.xlu0.b32.cont [3/16] 0.0, 128
    %182 = vxpose.xlu0.b32.cont [4/16] 0.0, 128
    %183 = vxpose.xlu0.b32.cont [5/16] 0.0, 128
    %184 = vxpose.xlu0.b32.cont [6/16] 0.0, 128
    %185 = vxpose.xlu0.b32.cont [7/16] 0.0, 128
    %186 = vxpose.xlu0.b32.cont [8/16] 0.0, 128
    %187 = vxpose.xlu0.b32.cont [9/16] 0.0, 128
    %188 = vxpose.xlu0.b32.cont [10/16] 0.0, 128
    %189 = vxpose.xlu0.b32.cont [11/16] 0.0, 128
    %190 = vxpose.xlu0.b32.cont [12/16] 0.0, 128
    %191 = vxpose.xlu0.b32.cont [13/16] 0.0, 128
    %192 = vxpose.xlu0.b32.cont [14/16] 0.0, 128
    %193 = vxpose.xlu0.b32.cont [15/16] 0.0, 128
    %194 = vxpose.xlu0.b32.end [16/16] 0.0, 128
    %v195 = vpop.trf.xlu0
    %v196 = vpop.trf.xlu0
    %v197 = vpop.trf.xlu0
    %v198 = vpop.trf.xlu0
    %v199 = vpop.trf.xlu0
    %v200 = vpop.trf.xlu0
    %v201 = vpop.trf.xlu0
    %v202 = vpop.trf.xlu0
    %v203 = vpop.trf.xlu0
    %v204 = vpop.trf.xlu0
    %v205 = vpop.trf.xlu0
    %v206 = vpop.trf.xlu0
    %v207 = vpop.trf.xlu0
    %v208 = vpop.trf.xlu0
    %v209 = vpop.trf.xlu0
    %v210 = vpop.trf.xlu0
    %v211 = vld [vmem:[%s2] sm:$0x7]
    %v212 = vld [vmem:[%s3] sm:$0x1]
    %v214 = vlaneseq
    %v215 = vshrl.u32 %v214, 7
    %v216 = vsub.s32 0, %v215
    %v217 = vrot.slane %v212, %v216
    %220 = vset.pattern.permute.xlu0 0
    %221 = vperm.xlu0 %220, %v163
    %v222 = vpop.permute.xlu0 %221
    %225 = vset.pattern.permute.xlu0 0
    %226 = vperm.xlu0 %225, %v195
    %v227 = vpop.permute.xlu0 %226
    %v229 = vlaneseq
    %v230 = vshrl.u32 %v229, 7
    %v231 = vsub.s32 0, %v230
    %v232 = vrot.slane %v211, %v231
    %v233 = vmul.f32 %v222, %v232
    %v234 = vmul.f32 %v227, %v232
    %v235 = vadd.f32 %v217, %v233
    %v236 = vadd.f32 %v217, %v234
    %237 = vset.pattern.permute.xlu0 1
    %238 = vperm.xlu0 %237, %v163
    %v239 = vpop.permute.xlu0 %238
    %241 = vset.pattern.permute.xlu0 1
    %242 = vperm.xlu0 %241, %v195
    %v243 = vpop.permute.xlu0 %242
    %v245 = vlaneseq
    %v246 = vshrl.u32 %v245, 7
    %v247 = vsub.s32 1, %v246
    %v248 = vrot.slane %v211, %v247
    %v249 = vmul.f32 %v239, %v248
    %v250 = vmul.f32 %v243, %v248
    %v251 = vadd.f32 %v235, %v249
    %v252 = vadd.f32 %v236, %v250
    %253 = vset.pattern.permute.xlu0 2
    %254 = vperm.xlu0 %253, %v163
    %v255 = vpop.permute.xlu0 %254
    %257 = vset.pattern.permute.xlu0 2
    %258 = vperm.xlu0 %257, %v195
    %v259 = vpop.permute.xlu0 %258
    %v261 = vlaneseq
    %v262 = vshrl.u32 %v261, 7
    %v263 = vsub.s32 2, %v262
    %v264 = vrot.slane %v211, %v263
    %v265 = vmul.f32 %v255, %v264
    %v266 = vmul.f32 %v259, %v264
    %v267 = vadd.f32 %v251, %v265
    %v268 = vadd.f32 %v252, %v266
    %v269 = vld [vmem:[%s4] sm:$0xff]
    %v270 = vld [vmem:[%s4 + $0x8] sm:$0xff]
    %273 = vrot.lane.b32.xlu0 %v269, 96
    %v274 = vpop.permute.xlu0 %273
    %275 = vrot.lane.b32.xlu0 %v270, 96
    %v276 = vpop.permute.xlu0 %275
    %vm279 = vcmask 785408
    %v280 = vsel %vm279, %v267, %v274
    %v281 = vsel %vm279, 0.0, %v276
    %v282 = vsel %vm279, %v268, %v274
    %283 = vst [vmem:[#allocation2] sm:$0xff] %v280
    %284 = vst [vmem:[#allocation2 + $0x8] sm:$0xff] %v281
    %285 = vst [vmem:[#allocation2 + $0x10] sm:$0xff] %v282
    %286 = vst [vmem:[#allocation2 + $0x18] sm:$0xff] %v281
    // Predicated region
    $region22: #{protein_designer_forward.1} parent=1 // pred_check
      _
    $region23: #{protein_designer_forward.1} parent=1 // pred_check_branch
      %288 = sbr.rel (0) target = $region25
    $region24: #{protein_designer_forward.1} parent=1 // pred_region
      _
    $region25: #{protein_designer_forward.1} parent=1 // pred_fallthru
      _
    // Predicated region
    $region26: #{protein_designer_forward.1} parent=1 // pred_check
      _
    $region27: #{protein_designer_forward.1} parent=1 // pred_check_branch
      %290 = sbr.rel (0) target = $region29
    $region28: #{protein_designer_forward.1} parent=1 // pred_region
      %s292 = ssub.s32 512, 512
      %293 = vsyncadd [#allocation3], %s292
      %s294 = sshll.u32 [#allocation2], 4
      %s295 = int_to_ptr.vmem [resolvable:$true] %s294
      %300 = dma.vmem_to_hbm [thread:$0]  %s295, 512, %s6, [#allocation3], 128, 128, 8
    $region29: #{protein_designer_forward.1} parent=1 // pred_fallthru
      _
    // Predicated region
    $region30: #{protein_designer_forward.1} parent=1 // pred_check
      _
    $region31: #{protein_designer_forward.1} parent=1 // pred_check_branch
      %302 = sbr.rel (0) target = $region33
    $region32: #{protein_designer_forward.1} parent=1 // pred_region
      _
    $region33: #{protein_designer_forward.1} parent=1 // pred_fallthru
      _
    // Predicated region
    $region34: #{protein_designer_forward.1} parent=1 // pred_check
      _
    $region35: #{protein_designer_forward.1} parent=1 // pred_check_branch
      %304 = sbr.rel (0) target = $region37
    $region36: #{protein_designer_forward.1} parent=1 // pred_region
      %305 = dma.done [#allocation3], 512
    $region37: #{protein_designer_forward.1} parent=1 // pred_fallthru
      _
    %306 = vsyncpa [#allocation3], 1

</llo_original>
